<compile_context>
chip_gen: v5e
topology: v5e:2x2
jax: 0.10.0
libtpu: 0.0.40
codegen_flags: <defaults>
</compile_context>

<pallas_src>
import jax
import jax.numpy as jnp
from jax import lax
from jax.experimental import pallas as pl
from jax.experimental.pallas import tpu as pltpu

# Network dimensions.
NF_IN = 2
H1, H2, H3 = 16, 32, 64
NF_OUT = 6
NF_OUT_PAD = 8          # pad 6 -> 8 so the output tile is 8-sublane aligned

# Packed parameter slab layout: one (120, 128) f32 array.
#   rows R1:R1+16  -> w1 (16,2)  in cols 0:2,  b1 in col 2
#   rows R2:R2+32  -> w2 (32,16) in cols 0:16, b2 in col 16
#   rows R3:R3+64  -> w3 (64,32) in cols 0:32, b3 in col 32
#   rows R4:R4+8   -> w4 (8,64)  in cols 0:64, b4 in col 64
#                     (rows 6,7 of w4 are 0, their bias is -1e30 => prob 0)
R1, R2, R3, R4 = 0, 16, 48, 112
SLAB_ROWS, SLAB_COLS = 120, 128
NEG_BIG = -1e30


def _make_kernel(chunk, n_chunks, compute_dtype):
    cdt = compute_dtype

    def kernel(x_ref, w_ref, o_ref):
        # Static slices of the VMEM-resident packed parameter slab; hoisted out
        # of the chunk loop (traced once per grid step).
        w1 = w_ref[R1:R1 + H1, 0:NF_IN].astype(cdt)           # (16, 2)
        b1 = w_ref[R1:R1 + H1, NF_IN:NF_IN + 1].astype(cdt)   # (16, 1)
        w2 = w_ref[R2:R2 + H2, 0:H1].astype(cdt)              # (32, 16)
        b2 = w_ref[R2:R2 + H2, H1:H1 + 1].astype(cdt)         # (32, 1)
        w3 = w_ref[R3:R3 + H3, 0:H2].astype(cdt)              # (64, 32)
        b3 = w_ref[R3:R3 + H3, H2:H2 + 1].astype(cdt)         # (64, 1)
        w4 = w_ref[R4:R4 + NF_OUT_PAD, 0:H3].astype(cdt)      # (8, 64)
        b4 = w_ref[R4:R4 + NF_OUT_PAD, H3:H3 + 1]             # (8, 1) f32 (keeps -1e30)

        def body(c, carry):
            off = pl.multiple_of(c * chunk, chunk)
            xs = x_ref[:, pl.ds(off, chunk)].astype(cdt)       # (2, chunk), batch on lanes

            # Layer 1 (K = 2): two broadcast FMAs on the VPU, skip the MXU.
            h = jnp.tanh(w1[:, 0:1] * xs[0:1, :] + w1[:, 1:2] * xs[1:2, :] + b1)
            # Layers 2/3: lane-dense MXU matmuls, f32 accumulation, tanh in cdt.
            h = jnp.tanh(
                jnp.dot(w2, h, preferred_element_type=jnp.float32).astype(cdt) + b2)
            h = jnp.tanh(
                jnp.dot(w3, h, preferred_element_type=jnp.float32).astype(cdt) + b3)
            # Layer 4 + softmax over features (axis 0 here); numerics in f32.
            logits = jnp.dot(w4, h, preferred_element_type=jnp.float32) + b4
            m = jnp.max(logits, axis=0, keepdims=True)
            e = jnp.exp(logits - m)
            probs = e / jnp.sum(e, axis=0, keepdims=True)      # exact normalization

            # Store batch-major: transpose the small (8, chunk) tile in-kernel
            # (XLU slack; kernel is EUP-bound), so the wrapper needs no output
            # transpose pass over HBM.
            o_ref[pl.ds(off, chunk), :] = probs.T.astype(o_ref.dtype)
            return carry

        lax.fori_loop(0, n_chunks, body, 0, unroll=True)

    return kernel


def pack_params(params):
    """Pack all weights/biases into a single (120, 128) f32 slab (done once)."""
    slab = jnp.zeros((SLAB_ROWS, SLAB_COLS), jnp.float32)
    slab = slab.at[R1:R1 + H1, 0:NF_IN].set(params["w1"])
    slab = slab.at[R1:R1 + H1, NF_IN].set(params["b1"][:, 0])
    slab = slab.at[R2:R2 + H2, 0:H1].set(params["w2"])
    slab = slab.at[R2:R2 + H2, H1].set(params["b2"][:, 0])
    slab = slab.at[R3:R3 + H3, 0:H2].set(params["w3"])
    slab = slab.at[R3:R3 + H3, H2].set(params["b3"][:, 0])
    slab = slab.at[R4:R4 + NF_OUT, 0:H3].set(params["w4"])
    slab = slab.at[R4:R4 + NF_OUT, H3].set(params["b4"][:, 0])
    # Dummy output rows: zero weights + very negative bias => softmax prob 0.
    slab = slab.at[R4 + NF_OUT:R4 + NF_OUT_PAD, H3].set(NEG_BIG)
    return slab


def greenbin_forward(x, wslab, *, tb=None, compute_dtype=jnp.float32):
    """x: (B, 2); wslab: packed (120, 128) f32 params.  Returns (B, 6) probs."""
    B = x.shape[0]
    if tb is None:
        b128 = pl.cdiv(B, 128) * 128
        # Aim for >= ~4 grid steps (v7x megacore sharding + DMA/compute overlap)
        # while amortizing per-step overhead; cap the lane tile at 4096 (f32
        # footprint per step stays < ~200 KiB -- tiny vs any generation's VMEM).
        tb = min(4096, max(128, pl.cdiv(max(b128 // 4, 1), 128) * 128))
    assert tb % 128 == 0
    chunk = 256                       # sub-tile kept in vregs (no spills)
    while tb % chunk:
        chunk //= 2
    n_chunks = tb // chunk
    Bp = pl.cdiv(B, tb) * tb
    grid = (Bp // tb,)

    # Single cheap pad+transpose of the tiny (B, 2) input -> batch on lanes.
    xt = jnp.zeros((NF_IN, Bp), jnp.float32).at[:, :B].set(
        x.astype(jnp.float32).T)

    kernel = _make_kernel(chunk, n_chunks, compute_dtype)

    out = pl.pallas_call(
        kernel,
        out_shape=jax.ShapeDtypeStruct((Bp, NF_OUT_PAD), jnp.float32),
        grid=grid,
        in_specs=[
            pl.BlockSpec((NF_IN, tb), lambda i: (0, i)),             # x tile, pipelined
            pl.BlockSpec((SLAB_ROWS, SLAB_COLS), lambda i: (0, 0)),  # params, VMEM-resident
        ],
        out_specs=pl.BlockSpec((tb, NF_OUT_PAD), lambda i: (i, 0)),
        compiler_params=pltpu.CompilerParams(
            dimension_semantics=("parallel",)),
    )(xt, wslab)

    # Output is already batch-major; just drop batch padding and dummy rows.
    return out[:B, :NF_OUT]


def init_params(key):
    """PyTorch nn.Linear-shaped params: W (out,in), b (out,1), U(-1/sqrt(in), 1/sqrt(in))."""
    dims = [(NF_IN, H1), (H1, H2), (H2, H3), (H3, NF_OUT)]
    params = {}
    keys = jax.random.split(key, 2 * len(dims))
    for i, (fan_in, fan_out) in enumerate(dims):
        bound = 1.0 / jnp.sqrt(float(fan_in))
        params[f"w{i + 1}"] = jax.random.uniform(
            keys[2 * i], (fan_out, fan_in), minval=-bound, maxval=bound,
            dtype=jnp.float32)
        params[f"b{i + 1}"] = jax.random.uniform(
            keys[2 * i + 1], (fan_out, 1), minval=-bound, maxval=bound,
            dtype=jnp.float32)
    return params


def reference_forward(x, params):
    h = jnp.tanh(x @ params["w1"].T + params["b1"].T)
    h = jnp.tanh(h @ params["w2"].T + params["b2"].T)
    h = jnp.tanh(h @ params["w3"].T + params["b3"].T)
    logits = h @ params["w4"].T + params["b4"].T
    return jax.nn.softmax(logits, axis=-1)


# TODO(synk): nn.BCELoss (self.loss_function) is training-only and not part of
# forward(); it is intentionally not implemented as a kernel.

if __name__ == "__main__":
    key = jax.random.PRNGKey(0)
    pkey, xkey = jax.random.split(key)
    params = init_params(pkey)
    wslab = pack_params(params)          # packed once, reused for every call

    # Small batch (single 128-lane tile, single grid step).
    B = 8
    x = jax.random.normal(xkey, (B, NF_IN), dtype=jnp.float32)
    out = jax.block_until_ready(greenbin_forward(x, wslab))
    ref = reference_forward(x, params)
    assert out.shape == (B, NF_OUT)
    assert jnp.allclose(out, ref, atol=1e-3, rtol=1e-3), "mismatch vs JAX reference"
    assert jnp.allclose(jnp.sum(out, axis=-1), jnp.ones((B,)), atol=1e-4)

    # Non-multiple batch with an explicit small tile: exercises the multi-step
    # grid, batch padding, the in-kernel chunk loop, and the pipelined x/out path.
    B2 = 300
    x2 = jax.random.normal(jax.random.PRNGKey(1), (B2, NF_IN), dtype=jnp.float32)
    out2 = jax.block_until_ready(greenbin_forward(x2, wslab, tb=128))
    ref2 = reference_forward(x2, params)
    assert out2.shape == (B2, NF_OUT)
    assert jnp.allclose(out2, ref2, atol=1e-3, rtol=1e-3), "mismatch (gridded path)"
    assert jnp.allclose(jnp.sum(out2, axis=-1), jnp.ones((B2,)), atol=1e-4)

    # bf16 fast path (v6e/v7x: bf16-native EUP/MXU).  Softmax stays f32, so rows
    # still sum to 1; elementwise values carry bf16 rounding.
    out3 = jax.block_until_ready(
        greenbin_forward(x2, wslab, compute_dtype=jnp.bfloat16))
    assert out3.shape == (B2, NF_OUT)
    assert jnp.allclose(out3, ref2, atol=5e-2, rtol=0.0), "mismatch (bf16 path)"
    assert jnp.allclose(jnp.sum(out3, axis=-1), jnp.ones((B2,)), atol=1e-3)

    print("KERNEL_OK")
</pallas_src>

<mosaic_0001>
module attributes {stable_mosaic.version = 11 : i64} {
  func.func @kernel(%arg0: i32, %arg1: memref<2x128xf32, #tpu.memory_space<vmem>>, %arg2: memref<120x128xf32, #tpu.memory_space<vmem>>, %arg3: memref<128x8xf32, #tpu.memory_space<vmem>>) attributes {dimension_semantics = [#tpu.dimension_semantics<parallel>], iteration_bounds = array<i64: 1>, scalar_prefetch = 0 : i64, scratch_operands = 0 : i64, tpu.core_type = #tpu.core_type<tc>, window_params = [{transform_indices = @transform_0, window_bounds = array<i64: 2, 128>}, {pipeline_mode = #tpu.pipeline_mode<synchronous>, transform_indices = @transform_1, window_bounds = array<i64: 120, 128>}, {transform_indices = @transform_2, window_bounds = array<i64: 128, 8>}]} {
    %c0 = arith.constant 0 : index
    %c0_0 = arith.constant 0 : index
    %0 = vector.load %arg2[%c0, %c0_0] : memref<120x128xf32, #tpu.memory_space<vmem>>, vector<16x2xf32>
    %c0_1 = arith.constant 0 : index
    %c2 = arith.constant 2 : index
    %1 = vector.load %arg2[%c0_1, %c2] : memref<120x128xf32, #tpu.memory_space<vmem>>, vector<16x1xf32>
    %c16 = arith.constant 16 : index
    %c0_2 = arith.constant 0 : index
    %2 = vector.load %arg2[%c16, %c0_2] : memref<120x128xf32, #tpu.memory_space<vmem>>, vector<32x16xf32>
    %c16_3 = arith.constant 16 : index
    %c16_4 = arith.constant 16 : index
    %3 = vector.load %arg2[%c16_3, %c16_4] : memref<120x128xf32, #tpu.memory_space<vmem>>, vector<32x1xf32>
    %c48 = arith.constant 48 : index
    %c0_5 = arith.constant 0 : index
    %4 = vector.load %arg2[%c48, %c0_5] : memref<120x128xf32, #tpu.memory_space<vmem>>, vector<64x32xf32>
    %c48_6 = arith.constant 48 : index
    %c32 = arith.constant 32 : index
    %5 = vector.load %arg2[%c48_6, %c32] : memref<120x128xf32, #tpu.memory_space<vmem>>, vector<64x1xf32>
    %c112 = arith.constant 112 : index
    %c0_7 = arith.constant 0 : index
    %6 = vector.load %arg2[%c112, %c0_7] : memref<120x128xf32, #tpu.memory_space<vmem>>, vector<8x64xf32>
    %c112_8 = arith.constant 112 : index
    %c64 = arith.constant 64 : index
    %7 = vector.load %arg2[%c112_8, %c64] : memref<120x128xf32, #tpu.memory_space<vmem>>, vector<8x1xf32>
    %c0_i32 = arith.constant 0 : i32
    %c128_i32 = arith.constant 128 : i32
    %8 = arith.muli %c0_i32, %c128_i32 : i32
    %9 = tpu.assume_multiple %8, 128 : i32
    %c0_9 = arith.constant 0 : index
    %10 = arith.index_cast %9 : i32 to index
    %11 = vector.load %arg1[%c0_9, %10] : memref<2x128xf32, #tpu.memory_space<vmem>>, vector<2x128xf32>
    %12 = vector.extract_strided_slice %0 {offsets = [0, 0], sizes = [16, 1], strides = [1, 1]} : vector<16x2xf32> to vector<16x1xf32>
    %13 = vector.extract_strided_slice %11 {offsets = [0, 0], sizes = [1, 128], strides = [1, 1]} : vector<2x128xf32> to vector<1x128xf32>
    %14 = vector.broadcast %12 : vector<16x1xf32> to vector<16x128xf32>
    %15 = vector.broadcast %13 : vector<1x128xf32> to vector<16x128xf32>
    %16 = arith.mulf %14, %15 : vector<16x128xf32>
    %17 = vector.extract_strided_slice %0 {offsets = [0, 1], sizes = [16, 1], strides = [1, 1]} : vector<16x2xf32> to vector<16x1xf32>
    %18 = vector.extract_strided_slice %11 {offsets = [1, 0], sizes = [1, 128], strides = [1, 1]} : vector<2x128xf32> to vector<1x128xf32>
    %19 = vector.broadcast %17 : vector<16x1xf32> to vector<16x128xf32>
    %20 = vector.broadcast %18 : vector<1x128xf32> to vector<16x128xf32>
    %21 = arith.mulf %19, %20 : vector<16x128xf32>
    %22 = arith.addf %16, %21 : vector<16x128xf32>
    %23 = vector.broadcast %1 : vector<16x1xf32> to vector<16x128xf32>
    %24 = arith.addf %22, %23 : vector<16x128xf32>
    %25 = math.tanh %24 : vector<16x128xf32>
    %cst = arith.constant dense<0.000000e+00> : vector<32x128xf32>
    %26 = tpu.matmul %2, %25, %cst {dimension_numbers = #tpu.dot_dimension_numbers<[1], [0], [0], [1], [0, 0, 1, 1], [], []>} : vector<32x16xf32>, vector<16x128xf32>, vector<32x128xf32> -> vector<32x128xf32>
    %27 = vector.broadcast %3 : vector<32x1xf32> to vector<32x128xf32>
    %28 = arith.addf %26, %27 : vector<32x128xf32>
    %29 = math.tanh %28 : vector<32x128xf32>
    %cst_10 = arith.constant dense<0.000000e+00> : vector<64x128xf32>
    %30 = tpu.matmul %4, %29, %cst_10 {dimension_numbers = #tpu.dot_dimension_numbers<[1], [0], [0], [1], [0, 0, 1, 1], [], []>} : vector<64x32xf32>, vector<32x128xf32>, vector<64x128xf32> -> vector<64x128xf32>
    %31 = vector.broadcast %5 : vector<64x1xf32> to vector<64x128xf32>
    %32 = arith.addf %30, %31 : vector<64x128xf32>
    %33 = math.tanh %32 : vector<64x128xf32>
    %cst_11 = arith.constant dense<0.000000e+00> : vector<8x128xf32>
    %34 = tpu.matmul %6, %33, %cst_11 {dimension_numbers = #tpu.dot_dimension_numbers<[1], [0], [0], [1], [0, 0, 1, 1], [], []>} : vector<8x64xf32>, vector<64x128xf32>, vector<8x128xf32> -> vector<8x128xf32>
    %35 = vector.broadcast %7 : vector<8x1xf32> to vector<8x128xf32>
    %36 = arith.addf %34, %35 : vector<8x128xf32>
    %cst_12 = arith.constant dense<0xFF800000> : vector<128xf32>
    %37 = vector.multi_reduction <maximumf>, %36, %cst_12 [0] : vector<8x128xf32> to vector<128xf32>
    %38 = vector.shape_cast %37 : vector<128xf32> to vector<1x128xf32>
    %39 = vector.broadcast %38 : vector<1x128xf32> to vector<8x128xf32>
    %40 = arith.subf %36, %39 : vector<8x128xf32>
    %41 = math.exp %40 : vector<8x128xf32>
    %cst_13 = arith.constant dense<0.000000e+00> : vector<128xf32>
    %42 = vector.multi_reduction <add>, %41, %cst_13 [0] : vector<8x128xf32> to vector<128xf32>
    %43 = vector.shape_cast %42 : vector<128xf32> to vector<1x128xf32>
    %44 = vector.broadcast %43 : vector<1x128xf32> to vector<8x128xf32>
    %45 = arith.divf %41, %44 : vector<8x128xf32>
    %46 = tpu.transpose %45, [1, 0] : vector<8x128xf32> -> vector<128x8xf32>
    %47 = arith.index_cast %9 : i32 to index
    %c0_14 = arith.constant 0 : index
    %48 = vector.load %arg3[%47, %c0_14] : memref<128x8xf32, #tpu.memory_space<vmem>>, vector<128x8xf32>
    tpu.vector_store %arg3[%47, %c0_14], %46 {strides = array<i32>} : memref<128x8xf32, #tpu.memory_space<vmem>>, vector<128x8xf32>,
    %c1_i32 = arith.constant 1 : i32
    return
  }
  func.func @transform_0(%arg0: i32) -> (i32, i32) {
    %c0_i32 = arith.constant 0 : i32
    %c0_i32_0 = arith.constant 0 : i32
    return %c0_i32, %arg0 : i32, i32
  }
  func.func @transform_1(%arg0: i32) -> (i32, i32) {
    %c0_i32 = arith.constant 0 : i32
    %c0_i32_0 = arith.constant 0 : i32
    %c0_i32_1 = arith.constant 0 : i32
    return %c0_i32, %c0_i32_0 : i32, i32
  }
  func.func @transform_2(%arg0: i32) -> (i32, i32) {
    %c0_i32 = arith.constant 0 : i32
    %c0_i32_0 = arith.constant 0 : i32
    return %arg0, %c0_i32 : i32, i32
  }
}

</mosaic_0001>

<llo_original>
// kernel: tpu_custom_call.1
$region0: #{tpu_custom_call.1}
  #allocation0 [shape = 'u32[]', space=smem, size = 0x4, offset = 0x4, fixed_abs, tag = 'smem constant byte address 0x4 - core index']
  #allocation1 [shape = 'u32[72,128]{1,0:T(1,128)}', space=vmem, size = 0x9000, scoped, tag = 'internal scratch']
  %s0 = inlined_call_operand.hbm [shape: f32[2,128], index: 0, kind: input, shape index: {}]
  %s1 = inlined_call_operand.hbm [shape: f32[120,128], index: 1, kind: input, shape index: {}]
  %s2 = inlined_call_operand.vmem [shape: f32[128,8], index: 2, kind: output, shape index: {}]
  %s3 = sld [smem:[#allocation0]]
  $region26: #{tpu_custom_call.1} parent=0
    _
  %s5 = ssub.s32 1, %s3
  %s6 = scalar_select 0, %s5, %s3
  $region1: #{tpu_custom_call.1} parent=0
    #allocation2 [shape = 'u8[1024]{0}', space=vmem, size = 0x400, scoped, tag = 'input window, operand 0, single buffered']
    #allocation3 [shape = 's32[1]{0}', space=sflag, size = 0x4, scoped, tag = 'scoped memory for tpu_custom_call.1']
    #allocation4 [shape = 'u8[61440]{0}', space=vmem, size = 0xf000, scoped, tag = 'input window, operand 1, single buffered']
    #allocation5 [shape = 's32[1]{0}', space=sflag, size = 0x4, scoped, tag = 'scoped memory for tpu_custom_call.1']
    %7 = vsyncpa [#allocation3], 0
    %8 = vsyncpa [#allocation5], 0
    // Predicated region
    $region2: #{tpu_custom_call.1} parent=1 // pred_check
      _
    $region3: #{tpu_custom_call.1} parent=1 // pred_check_branch
      %10 = sbr.rel (0) target = $region5
    $region4: #{tpu_custom_call.1} parent=1 // pred_region
      %12 = vsyncadd [#allocation3], 0
      %s14 = sshll.u32 %s0, 4
      %s15 = int_to_ptr.hbm [resolvable:$true] %s14
      %s16 = sshll.u32 [#allocation2], 4
      %s17 = int_to_ptr.vmem [resolvable:$true] %s16
      %19 = dma.hbm_to_vmem [thread:$0]  %s15, 32, %s17, [#allocation3]
    $region5: #{tpu_custom_call.1} parent=1 // pred_fallthru
      _
    // Predicated region
    $region6: #{tpu_custom_call.1} parent=1 // pred_check
      _
    $region7: #{tpu_custom_call.1} parent=1 // pred_check_branch
      %21 = sbr.rel (0) target = $region9
    $region8: #{tpu_custom_call.1} parent=1 // pred_region
      %23 = vsyncadd [#allocation5], 0
      %s24 = sshll.u32 %s1, 4
      %s25 = int_to_ptr.hbm [resolvable:$true] %s24
      %s26 = sshll.u32 [#allocation4], 4
      %s27 = int_to_ptr.vmem [resolvable:$true] %s26
      %32 = dma.hbm_to_vmem [thread:$0]  %s25, 1920, %s27, [#allocation5], 128, 128, 8
    $region9: #{tpu_custom_call.1} parent=1 // pred_fallthru
      _
    // Predicated region
    $region10: #{tpu_custom_call.1} parent=1 // pred_check
      _
    $region11: #{tpu_custom_call.1} parent=1 // pred_check_branch
      %34 = sbr.rel (0) target = $region13
    $region12: #{tpu_custom_call.1} parent=1 // pred_region
      %36 = dma.done [#allocation3], 32
    $region13: #{tpu_custom_call.1} parent=1 // pred_fallthru
      _
    // Predicated region
    $region14: #{tpu_custom_call.1} parent=1 // pred_check
      _
    $region15: #{tpu_custom_call.1} parent=1 // pred_check_branch
      %38 = sbr.rel (0) target = $region17
    $region16: #{tpu_custom_call.1} parent=1 // pred_region
      %40 = dma.done [#allocation5], 1920
    $region17: #{tpu_custom_call.1} parent=1 // pred_fallthru
      _
    %v41 = vld [vmem:[#allocation4] sm:$0xff]
    %v42 = vld [vmem:[#allocation4 + $0x8] sm:$0xff]
    %v43 = vld [vmem:[#allocation4 + $0x10] sm:$0xff]
    %v44 = vld [vmem:[#allocation4 + $0x18] sm:$0xff]
    %v45 = vld [vmem:[#allocation4 + $0x20] sm:$0xff]
    %v46 = vld [vmem:[#allocation4 + $0x28] sm:$0xff]
    %v47 = vld [vmem:[#allocation4 + $0x30] sm:$0xff]
    %v48 = vld [vmem:[#allocation4 + $0x38] sm:$0xff]
    %v49 = vld [vmem:[#allocation4 + $0x40] sm:$0xff]
    %v50 = vld [vmem:[#allocation4 + $0x48] sm:$0xff]
    %v51 = vld [vmem:[#allocation4 + $0x50] sm:$0xff]
    %v52 = vld [vmem:[#allocation4 + $0x58] sm:$0xff]
    %v53 = vld [vmem:[#allocation4 + $0x60] sm:$0xff]
    %v54 = vld [vmem:[#allocation4 + $0x68] sm:$0xff]
    %v55 = vld [vmem:[#allocation4 + $0x70] sm:$0xff]
    %v56 = vld [vmem:[#allocation2] sm:$0x3]
    %58 = vset.pattern.permute.xlu0 0
    %59 = vperm.xlu0 %58, %v41
    %v60 = vpop.permute.xlu0 %59
    %63 = vset.pattern.permute.xlu0 0
    %64 = vperm.xlu0 %63, %v42
    %v65 = vpop.permute.xlu0 %64
    %v67 = vperm.slane %v56, 0
    %v68 = vmul.f32 %v60, %v67
    %v69 = vmul.f32 %v65, %v67
    %70 = vset.pattern.permute.xlu0 1
    %71 = vperm.xlu0 %70, %v41
    %v72 = vpop.permute.xlu0 %71
    %74 = vset.pattern.permute.xlu0 1
    %75 = vperm.xlu0 %74, %v42
    %v76 = vpop.permute.xlu0 %75
    %v78 = vperm.slane %v56, 1
    %v79 = vmul.f32 %v72, %v78
    %v80 = vmul.f32 %v76, %v78
    %v81 = vadd.f32 %v68, %v79
    %v82 = vadd.f32 %v69, %v80
    %83 = vset.pattern.permute.xlu0 2
    %84 = vperm.xlu0 %83, %v41
    %v85 = vpop.permute.xlu0 %84
    %87 = vset.pattern.permute.xlu0 2
    %88 = vperm.xlu0 %87, %v42
    %v89 = vpop.permute.xlu0 %88
    %v91 = vadd.f32 %v81, %v85
    %v92 = vadd.f32 %v82, %v89
    %v93 = vtanh.pop %v91
    %v94 = vtanh.pop %v92
    %96 = vset.pattern.permute.xlu0 16
    %97 = vperm.xlu0 %96, %v43
    %v98 = vpop.permute.xlu0 %97
    %101 = vset.pattern.permute.xlu0 16
    %102 = vperm.xlu0 %101, %v44
    %v103 = vpop.permute.xlu0 %102
    %106 = vset.pattern.permute.xlu0 16
    %107 = vperm.xlu0 %106, %v45
    %v108 = vpop.permute.xlu0 %107
    %111 = vset.pattern.permute.xlu0 16
    %112 = vperm.xlu0 %111, %v46
    %v113 = vpop.permute.xlu0 %112
    %vm115 = vcmask 130048
    %v116 = vsel %vm115, %v43, 0
    %v118 = vsel %vm115, %v44, 0
    %v120 = vsel %vm115, %v45, 0
    %v122 = vsel %vm115, %v46, 0
    %124 = vmatpush.msra.mxu0 0.0
    %125 = vmatpush.msra.mxu0 0.0
    %126 = vmatpush.msra.mxu0 0.0
    %127 = vmatpush.msra.mxu0 0.0
    %128 = vmatpush.msra.mxu0 0.0
    %129 = vmatpush.msra.mxu0 0.0
    %130 = vmatpush.msra.mxu0 0.0
    %131 = vmatpush.msra.mxu0 0.0
    %132 = vmatpush.msra.mxu0 0.0
    %133 = vmatpush.msra.mxu0 0.0
    %134 = vmatpush.msra.mxu0 0.0
    %135 = vmatpush.msra.mxu0 0.0
    %136 = vmatpush.msra.mxu0 0.0
    %137 = vmatpush.msra.mxu0 0.0
    %138 = vmatpush.msra.mxu0 %v94
    %139 = vmatpush.msra.mxu0 %v93
    %140 = vmatmul.f32.gmra.mxu0 %v116
    %v141 = vpop.f32.mrf.mxu0
    %v142 = vadd.f32 %v98, %v141
    %143 = vmatmul.f32.gmra.mxu0 %v118
    %v144 = vpop.f32.mrf.mxu0
    %v145 = vadd.f32 %v103, %v144
    %146 = vmatmul.f32.gmra.mxu0 %v120
    %v147 = vpop.f32.mrf.mxu0
    %v148 = vadd.f32 %v108, %v147
    %149 = vmatmul.f32.gmra.mxu0 %v122
    %v150 = vpop.f32.mrf.mxu0
    %v151 = vadd.f32 %v113, %v150
    %152 = vdwg.mxu0
    %v153 = vtanh.pop %v142
    %v154 = vtanh.pop %v145
    %v155 = vtanh.pop %v148
    %v156 = vtanh.pop %v151
    %158 = vset.pattern.permute.xlu0 32
    %159 = vperm.xlu0 %158, %v47
    %v160 = vpop.permute.xlu0 %159
    %163 = vset.pattern.permute.xlu0 32
    %164 = vperm.xlu0 %163, %v48
    %v165 = vpop.permute.xlu0 %164
    %168 = vset.pattern.permute.xlu0 32
    %169 = vperm.xlu0 %168, %v49
    %v170 = vpop.permute.xlu0 %169
    %173 = vset.pattern.permute.xlu0 32
    %174 = vperm.xlu0 %173, %v50
    %v175 = vpop.permute.xlu0 %174
    %178 = vset.pattern.permute.xlu0 32
    %179 = vperm.xlu0 %178, %v51
    %v180 = vpop.permute.xlu0 %179
    %183 = vset.pattern.permute.xlu0 32
    %184 = vperm.xlu0 %183, %v52
    %v185 = vpop.permute.xlu0 %184
    %188 = vset.pattern.permute.xlu0 32
    %189 = vperm.xlu0 %188, %v53
    %v190 = vpop.permute.xlu0 %189
    %193 = vset.pattern.permute.xlu0 32
    %194 = vperm.xlu0 %193, %v54
    %v195 = vpop.permute.xlu0 %194
    %vm197 = vcmask 261120
    %v198 = vsel %vm197, %v47, 0
    %v200 = vsel %vm197, %v48, 0
    %v202 = vsel %vm197, %v49, 0
    %v204 = vsel %vm197, %v50, 0
    %v206 = vsel %vm197, %v51, 0
    %v208 = vsel %vm197, %v52, 0
    %v210 = vsel %vm197, %v53, 0
    %v212 = vsel %vm197, %v54, 0
    %214 = vmatpush.msra.mxu0 0.0
    %215 = vmatpush.msra.mxu0 0.0
    %216 = vmatpush.msra.mxu0 0.0
    %217 = vmatpush.msra.mxu0 0.0
    %218 = vmatpush.msra.mxu0 0.0
    %219 = vmatpush.msra.mxu0 0.0
    %220 = vmatpush.msra.mxu0 0.0
    %221 = vmatpush.msra.mxu0 0.0
    %222 = vmatpush.msra.mxu0 0.0
    %223 = vmatpush.msra.mxu0 0.0
    %224 = vmatpush.msra.mxu0 0.0
    %225 = vmatpush.msra.mxu0 0.0
    %226 = vmatpush.msra.mxu0 %v156
    %227 = vmatpush.msra.mxu0 %v155
    %228 = vmatpush.msra.mxu0 %v154
    %229 = vmatpush.msra.mxu0 %v153
    %230 = vmatmul.f32.gmra.mxu0 %v198
    %v231 = vpop.f32.mrf.mxu0
    %v232 = vadd.f32 %v160, %v231
    %233 = vmatmul.f32.gmra.mxu0 %v200
    %v234 = vpop.f32.mrf.mxu0
    %v235 = vadd.f32 %v165, %v234
    %236 = vmatmul.f32.gmra.mxu0 %v202
    %v237 = vpop.f32.mrf.mxu0
    %v238 = vadd.f32 %v170, %v237
    %239 = vmatmul.f32.gmra.mxu0 %v204
    %v240 = vpop.f32.mrf.mxu0
    %v241 = vadd.f32 %v175, %v240
    %242 = vmatmul.f32.gmra.mxu0 %v206
    %v243 = vpop.f32.mrf.mxu0
    %v244 = vadd.f32 %v180, %v243
    %245 = vmatmul.f32.gmra.mxu0 %v208
    %v246 = vpop.f32.mrf.mxu0
    %v247 = vadd.f32 %v185, %v246
    %248 = vmatmul.f32.gmra.mxu0 %v210
    %v249 = vpop.f32.mrf.mxu0
    %v250 = vadd.f32 %v190, %v249
    %251 = vmatmul.f32.gmra.mxu0 %v212
    %v252 = vpop.f32.mrf.mxu0
    %v253 = vadd.f32 %v195, %v252
    %254 = vdwg.mxu0
    %v255 = vtanh.pop %v232
    %v256 = vtanh.pop %v235
    %v257 = vtanh.pop %v238
    %v258 = vtanh.pop %v241
    %v259 = vtanh.pop %v244
    %v260 = vtanh.pop %v247
    %v261 = vtanh.pop %v250
    %v262 = vtanh.pop %v253
    %264 = vset.pattern.permute.xlu0 64
    %265 = vperm.xlu0 %264, %v55
    %v266 = vpop.permute.xlu0 %265
    %vm268 = vcmask 523264
    %v269 = vsel %vm268, %v55, 0
    %271 = vmatpush.msra.mxu0 0.0
    %272 = vmatpush.msra.mxu0 0.0
    %273 = vmatpush.msra.mxu0 0.0
    %274 = vmatpush.msra.mxu0 0.0
    %275 = vmatpush.msra.mxu0 0.0
    %276 = vmatpush.msra.mxu0 0.0
    %277 = vmatpush.msra.mxu0 0.0
    %278 = vmatpush.msra.mxu0 0.0
    %279 = vmatpush.msra.mxu0 %v262
    %280 = vmatpush.msra.mxu0 %v261
    %281 = vmatpush.msra.mxu0 %v260
    %282 = vmatpush.msra.mxu0 %v259
    %283 = vmatpush.msra.mxu0 %v258
    %284 = vmatpush.msra.mxu0 %v257
    %285 = vmatpush.msra.mxu0 %v256
    %286 = vmatpush.msra.mxu0 %v255
    %287 = vmatmul.f32.gmra.mxu0 %v269
    %v288 = vpop.f32.mrf.mxu0
    %v289 = vadd.f32 %v266, %v288
    %290 = vdwg.mxu0
    %v291 = vrot.slane %v289, 4
    %v292 = vmax.f32 %v289, %v291
    %v293 = vrot.slane %v292, 2
    %v294 = vmax.f32 %v292, %v293
    %v295 = vrot.slane %v294, 1
    %v296 = vmax.f32 %v294, %v295
    %v297 = vsub.f32 %v289, %v296
    %v298 = vmul.f32 %v297, 1.442695
    %v299 = vpow.pop %v298
    %v300 = vrot.slane %v299, 4
    %v301 = vadd.f32 %v299, %v300
    %v302 = vrot.slane %v301, 2
    %v303 = vadd.f32 %v301, %v302
    %v304 = vrot.slane %v303, 1
    %v305 = vadd.f32 %v303, %v304
    %v306 = vrcp.pop %v305
    %v307 = vmul.f32 %v305, %v306
    %v308 = vsub.f32 1.0, %v307
    %v309 = vmul.f32 %v306, %v308
    %v310 = vadd.f32 %v306, %v309
    %vm311 = vweird.f32 %v305
    %vm312 = vweird.f32 %v306
    %vm313 = vmor %vm311, %vm312
    %v314 = vsel %vm313, %v306, %v310
    %v315 = vand.u32 2147483647, %v305
    %vm316 = vcmp.eq.f32.partialorder %v315, 8.507059e+37
    %v317 = vand.u32 %v305, 2147483648
    %v318 = vor.u32 1.1754944e-38, %v317
    %v319 = vsel %vm316, %v318, %v314
    %v320 = vmul.f32 %v299, %v319
    %321 = vxpose.xlu0.b32.start [1/16] %v320, 128
    %322 = vxpose.xlu0.b32.cont [2/16] 0.0, 128
    %323 = vxpose.xlu0.b32.cont [3/16] 0.0, 128
    %324 = vxpose.xlu0.b32.cont [4/16] 0.0, 128
    %325 = vxpose.xlu0.b32.cont [5/16] 0.0, 128
    %326 = vxpose.xlu0.b32.cont [6/16] 0.0, 128
    %327 = vxpose.xlu0.b32.cont [7/16] 0.0, 128
    %328 = vxpose.xlu0.b32.cont [8/16] 0.0, 128
    %329 = vxpose.xlu0.b32.cont [9/16] 0.0, 128
    %330 = vxpose.xlu0.b32.cont [10/16] 0.0, 128
    %331 = vxpose.xlu0.b32.cont [11/16] 0.0, 128
    %332 = vxpose.xlu0.b32.cont [12/16] 0.0, 128
    %333 = vxpose.xlu0.b32.cont [13/16] 0.0, 128
    %334 = vxpose.xlu0.b32.cont [14/16] 0.0, 128
    %335 = vxpose.xlu0.b32.cont [15/16] 0.0, 128
    %336 = vxpose.xlu0.b32.end [16/16] 0.0, 128
    %v337 = vpop.trf.xlu0
    %v338 = vpop.trf.xlu0
    %v339 = vpop.trf.xlu0
    %v340 = vpop.trf.xlu0
    %v341 = vpop.trf.xlu0
    %v342 = vpop.trf.xlu0
    %v343 = vpop.trf.xlu0
    %v344 = vpop.trf.xlu0
    %v345 = vpop.trf.xlu0
    %v346 = vpop.trf.xlu0
    %v347 = vpop.trf.xlu0
    %v348 = vpop.trf.xlu0
    %v349 = vpop.trf.xlu0
    %v350 = vpop.trf.xlu0
    %v351 = vpop.trf.xlu0
    %v352 = vpop.trf.xlu0
    %vm353 = vcmask 64512
    %354 = vst.msk [vmem:[%s2] sm:$0xff] %vm353, %v337
    %355 = vst.msk [vmem:[%s2 + $0x8] sm:$0xff] %vm353, %v338
    %356 = vst.msk [vmem:[%s2 + $0x10] sm:$0xff] %vm353, %v339
    %357 = vst.msk [vmem:[%s2 + $0x18] sm:$0xff] %vm353, %v340
    %358 = vst.msk [vmem:[%s2 + $0x20] sm:$0xff] %vm353, %v341
    %359 = vst.msk [vmem:[%s2 + $0x28] sm:$0xff] %vm353, %v342
    %360 = vst.msk [vmem:[%s2 + $0x30] sm:$0xff] %vm353, %v343
    %361 = vst.msk [vmem:[%s2 + $0x38] sm:$0xff] %vm353, %v344
    %362 = vst.msk [vmem:[%s2 + $0x40] sm:$0xff] %vm353, %v345
    %363 = vst.msk [vmem:[%s2 + $0x48] sm:$0xff] %vm353, %v346
    %364 = vst.msk [vmem:[%s2 + $0x50] sm:$0xff] %vm353, %v347
    %365 = vst.msk [vmem:[%s2 + $0x58] sm:$0xff] %vm353, %v348
    %366 = vst.msk [vmem:[%s2 + $0x60] sm:$0xff] %vm353, %v349
    %367 = vst.msk [vmem:[%s2 + $0x68] sm:$0xff] %vm353, %v350
    %368 = vst.msk [vmem:[%s2 + $0x70] sm:$0xff] %vm353, %v351
    %369 = vst.msk [vmem:[%s2 + $0x78] sm:$0xff] %vm353, %v352
    // Predicated region
    $region18: #{tpu_custom_call.1} parent=1 // pred_check
      _
    $region19: #{tpu_custom_call.1} parent=1 // pred_check_branch
      %371 = sbr.rel (0) target = $region21
    $region20: #{tpu_custom_call.1} parent=1 // pred_region
      _
    $region21: #{tpu_custom_call.1} parent=1 // pred_fallthru
      _
    // Predicated region
    $region22: #{tpu_custom_call.1} parent=1 // pred_check
      _
    $region23: #{tpu_custom_call.1} parent=1 // pred_check_branch
      %373 = sbr.rel (0) target = $region25
    $region24: #{tpu_custom_call.1} parent=1 // pred_region
      _
    $region25: #{tpu_custom_call.1} parent=1 // pred_fallthru
      _
    %374 = vsyncpa [#allocation3], 1
    %375 = vsyncpa [#allocation5], 1

</llo_original>
